<compile_context>
chip_gen: v7x
topology: tpu7x:2x2x1
jax: 0.10.0
libtpu: 0.0.40
codegen_flags: <defaults>
</compile_context>

<pallas_src>
import functools
import math

import jax
import jax.numpy as jnp
from jax import lax
from jax.experimental import pallas as pl
from jax.experimental.pallas import tpu as pltpu


# ---------------------------------------------------------------------------
# Shared in-kernel helper: k-tap channel conv (zero padded) + sigmoid.
# ---------------------------------------------------------------------------
def _conv_sigmoid(avg, w_ref, kernel_size):
    """avg: (Bt, C) f32 channel means -> sigmoid(conv1d_k(avg)) as (Bt, C) f32."""
    Bt, C = avg.shape
    pad = kernel_size // 2
    c_idx = lax.broadcasted_iota(jnp.int32, (Bt, C), 1)
    conv = jnp.zeros_like(avg)
    for j in range(kernel_size):                      # tiny static trip count
        s = j - pad                                   # out[c] += w[j]*avg[c+s]
        if s == 0:
            shifted = avg
        else:
            rolled = pltpu.roll(avg, shift=(-s) % C, axis=1)   # XLU, cheap
            valid = (c_idx + s >= 0) & (c_idx + s < C)
            shifted = jnp.where(valid, rolled, 0.0)
        conv = conv + w_ref[j] * shifted
    return jax.nn.sigmoid(conv)


# ---------------------------------------------------------------------------
# Fast path: whole per-sample slab resident in VMEM (pool+conv+rescale fused).
# ---------------------------------------------------------------------------
def _eca_resident_kernel(w_ref, x_ref, o_ref, *, kernel_size, inv_hw):
    # w_ref: SMEM (kernel_size,) conv1d weights
    # x_ref: VMEM (Bt, C, H*W) batch tile, lane-dense in H*W
    x = x_ref[...]                                    # input dtype, no f32 slab
    avg = jnp.sum(x, axis=-1, dtype=jnp.float32) * inv_hw        # (Bt, C) f32
    attn = _conv_sigmoid(avg, w_ref, kernel_size)                # (Bt, C) f32
    o_ref[...] = x * attn.astype(x.dtype)[:, :, None]


# ---------------------------------------------------------------------------
# Fallback path pass 1: spatially tiled pooled-sum + attention weights.
# ---------------------------------------------------------------------------
def _eca_pool_kernel(w_ref, x_ref, attn_ref, acc_ref, *, kernel_size, inv_hw):
    h = pl.program_id(1)

    @pl.when(h == 0)
    def _():
        acc_ref[...] = jnp.zeros_like(acc_ref)

    acc_ref[...] += jnp.sum(x_ref[...], axis=-1, keepdims=True,
                            dtype=jnp.float32)        # (Bt, C, 1)

    @pl.when(h == pl.num_programs(1) - 1)
    def _():
        avg = acc_ref[...][:, :, 0] * inv_hw          # (Bt, C)
        attn = _conv_sigmoid(avg, w_ref, kernel_size)
        attn_ref[...] = attn[:, :, None]


# ---------------------------------------------------------------------------
# Fallback path pass 2: rescale x tiles by the per-channel attention.
# ---------------------------------------------------------------------------
def _eca_rescale_kernel(x_ref, attn_ref, o_ref):
    x = x_ref[...]
    o_ref[...] = x * attn_ref[...].astype(x.dtype)    # (Bt,C,1) lane splat


# ---------------------------------------------------------------------------
# Tiling helpers.
# ---------------------------------------------------------------------------
def _choose_batch_tile(B, bytes_per_sample, budget_bytes, prefer_min_steps=2):
    """Largest divisor of B whose block fits the budget; prefer >=2 steps."""
    divisors = [d for d in range(1, B + 1) if B % d == 0]
    fitting = [d for d in divisors if d * bytes_per_sample <= budget_bytes]
    if not fitting:
        return 1
    preferred = [d for d in fitting if B // d >= prefer_min_steps]
    return max(preferred) if preferred else max(fitting)


def _choose_hw_tile(HW, C, itemsize, budget_bytes):
    """Largest multiple-of-128 divisor of HW whose (C, THW) slab fits budget."""
    cands = [d for d in range(128, HW + 1, 128) if HW % d == 0]
    fitting = [d for d in cands if C * d * itemsize <= budget_bytes]
    if fitting:
        return max(fitting)
    return min(cands)


# ---------------------------------------------------------------------------
# Wrappers.
# ---------------------------------------------------------------------------
def _eca_resident(x3, weight, kernel_size, budget_bytes):
    B, C, HW = x3.shape
    itemsize = jnp.dtype(x3.dtype).itemsize
    Bt = _choose_batch_tile(B, C * HW * itemsize, budget_bytes)
    nb = B // Bt

    kernel = functools.partial(
        _eca_resident_kernel, kernel_size=kernel_size, inv_hw=1.0 / float(HW))

    cost = pl.CostEstimate(
        flops=2 * B * C * HW + 2 * B * C * kernel_size,
        transcendentals=B * C,
        bytes_accessed=2 * B * C * HW * itemsize
        + weight.size * jnp.dtype(weight.dtype).itemsize,
    )

    return pl.pallas_call(
        kernel,
        out_shape=jax.ShapeDtypeStruct((B, C, HW), x3.dtype),
        grid=(nb,),
        in_specs=[
            pl.BlockSpec(memory_space=pltpu.SMEM),                # conv weights
            pl.BlockSpec((Bt, C, HW), lambda b: (b, 0, 0)),       # x tile
        ],
        out_specs=pl.BlockSpec((Bt, C, HW), lambda b: (b, 0, 0)),
        compiler_params=pltpu.CompilerParams(
            dimension_semantics=("parallel",)),
        cost_estimate=cost,
    )(weight, x3)


def _eca_tiled(x3, weight, kernel_size, budget_bytes):
    B, C, HW = x3.shape
    itemsize = jnp.dtype(x3.dtype).itemsize

    THW = _choose_hw_tile(HW, C, itemsize, budget_bytes)
    nhw = HW // THW
    Bt = _choose_batch_tile(B, C * THW * itemsize, budget_bytes)
    nb = B // Bt
    inv_hw = 1.0 / float(HW)

    # Pass 1: pooled sum over spatial tiles -> per-(batch,channel) attention.
    pool_kernel = functools.partial(
        _eca_pool_kernel, kernel_size=kernel_size, inv_hw=inv_hw)
    attn = pl.pallas_call(
        pool_kernel,
        out_shape=jax.ShapeDtypeStruct((B, C, 1), jnp.float32),
        grid=(nb, nhw),
        in_specs=[
            pl.BlockSpec(memory_space=pltpu.SMEM),                 # conv weights
            pl.BlockSpec((Bt, C, THW), lambda b, h: (b, 0, h)),    # x tile
        ],
        out_specs=pl.BlockSpec((Bt, C, 1), lambda b, h: (b, 0, 0)),
        scratch_shapes=[pltpu.VMEM((Bt, C, 1), jnp.float32)],
        compiler_params=pltpu.CompilerParams(
            dimension_semantics=("parallel", "arbitrary")),
        cost_estimate=pl.CostEstimate(
            flops=B * C * HW + 2 * B * C * kernel_size,
            transcendentals=B * C,
            bytes_accessed=B * C * HW * itemsize + 4 * B * C,
        ),
    )(weight, x3)

    # Pass 2: rescale x tile by tile.
    out3 = pl.pallas_call(
        _eca_rescale_kernel,
        out_shape=jax.ShapeDtypeStruct((B, C, HW), x3.dtype),
        grid=(nb, nhw),
        in_specs=[
            pl.BlockSpec((Bt, C, THW), lambda b, h: (b, 0, h)),
            pl.BlockSpec((Bt, C, 1), lambda b, h: (b, 0, 0)),
        ],
        out_specs=pl.BlockSpec((Bt, C, THW), lambda b, h: (b, 0, h)),
        compiler_params=pltpu.CompilerParams(
            dimension_semantics=("parallel", "parallel")),
        cost_estimate=pl.CostEstimate(
            flops=B * C * HW,
            transcendentals=0,
            bytes_accessed=2 * B * C * HW * itemsize + 4 * B * C,
        ),
    )(x3, attn)
    return out3


def eca_forward(x, weight, kernel_size, *, block_budget_bytes=2 << 20):
    B, C, H, W = x.shape
    HW = H * W
    itemsize = jnp.dtype(x.dtype).itemsize

    # Lane-dense view: (B, C, H*W). Wrapper-side reshape is layout plumbing.
    x3 = x.reshape(B, C, HW)
    per_sample_bytes = C * HW * itemsize

    if per_sample_bytes <= block_budget_bytes or HW % 128 != 0:
        out3 = _eca_resident(x3, weight, kernel_size, block_budget_bytes)
    else:
        out3 = _eca_tiled(x3, weight, kernel_size, block_budget_bytes)
    return out3.reshape(B, C, H, W)


def eca_reference(x, weight, kernel_size):
    """Pure-JAX reference matching the PyTorch forward pass."""
    B, C, H, W = x.shape
    avg = jnp.mean(x, axis=(2, 3))                 # (B, C)
    pad = kernel_size // 2
    padded = jnp.pad(avg, ((0, 0), (pad, pad)))
    conv = sum(weight[j] * padded[:, j:j + C] for j in range(kernel_size))
    attn = jax.nn.sigmoid(conv)
    return x * attn[:, :, None, None]


if __name__ == "__main__":
    B, C, H, W = 4, 32, 16, 16
    gamma, b_ = 2, 1

    # kernel_size exactly as in eca_block.__init__
    kernel_size = int(abs((math.log(C, 2) + b_) / gamma))
    kernel_size = kernel_size if kernel_size % 2 else kernel_size + 1

    key = jax.random.PRNGKey(0)
    kx, kw = jax.random.split(key)
    x = jax.random.uniform(kx, (B, C, H, W), dtype=jnp.float32)

    # Deterministic Conv1d(1, 1, kernel_size, bias=False) weight init
    # (uniform in +/- 1/sqrt(fan_in), fan_in = kernel_size).
    bound = 1.0 / math.sqrt(kernel_size)
    weight = jax.random.uniform(
        kw, (kernel_size,), dtype=jnp.float32, minval=-bound, maxval=bound)

    ref = eca_reference(x, weight, kernel_size)

    # Fast path: per-sample slab resident in VMEM.
    out = eca_forward(x, weight, kernel_size)
    out = jax.block_until_ready(out)
    assert out.shape == (B, C, H, W)
    assert jnp.allclose(out, ref, atol=1e-5, rtol=1e-5)

    # Fallback path: force a tiny budget so the spatially tiled two-pass
    # pipeline (for large feature maps) is exercised and checked too.
    out_tiled = eca_forward(x, weight, kernel_size,
                            block_budget_bytes=16 * 1024)
    out_tiled = jax.block_until_ready(out_tiled)
    assert jnp.allclose(out_tiled, ref, atol=1e-5, rtol=1e-5)

    print("KERNEL_OK")
</pallas_src>

<mosaic_0001>
module attributes {stable_mosaic.version = 11 : i64} {
  func.func @_eca_resident_kernel(%arg0: i32, %arg1: memref<3xf32, #tpu.memory_space<smem>>, %arg2: memref<2x32x256xf32, #tpu.memory_space<vmem>>, %arg3: memref<2x32x256xf32, #tpu.memory_space<vmem>>) attributes {dimension_semantics = [#tpu.dimension_semantics<parallel>], iteration_bounds = array<i64: 2>, scalar_prefetch = 0 : i64, scratch_operands = 0 : i64, tpu.core_type = #tpu.core_type<tc>, window_params = [{transform_indices = @transform_0, window_bounds = array<i64: 3>}, {transform_indices = @transform_1, window_bounds = array<i64: 2, 32, 256>}, {transform_indices = @transform_2, window_bounds = array<i64: 2, 32, 256>}]} {
    %c0 = arith.constant 0 : index
    %c0_0 = arith.constant 0 : index
    %c0_1 = arith.constant 0 : index
    %0 = vector.load %arg2[%c0, %c0_0, %c0_1] : memref<2x32x256xf32, #tpu.memory_space<vmem>>, vector<2x32x256xf32>
    %cst = arith.constant dense<0.000000e+00> : vector<2x32xf32>
    %1 = vector.multi_reduction <add>, %0, %cst [2] : vector<2x32x256xf32> to vector<2x32xf32>
    %cst_2 = arith.constant 3.906250e-03 : f32
    %2 = vector.broadcast %cst_2 : f32 to vector<2x32xf32>
    %3 = arith.mulf %1, %2 : vector<2x32xf32>
    %4 = tpu.iota {dimensions = array<i32: 1>} : vector<2x32xi32>
    %cst_3 = arith.constant 0.000000e+00 : f32
    %5 = vector.broadcast %cst_3 : f32 to vector<2x32xf32>
    %c1_i32 = arith.constant 1 : i32
    %6 = tpu.dynamic_rotate %3 by %c1_i32 dim 1 : vector<2x32xf32>, i32 -> vector<2x32xf32>
    %c-1_i32 = arith.constant -1 : i32
    %7 = vector.broadcast %c-1_i32 : i32 to vector<2x32xi32>
    %8 = arith.addi %4, %7 : vector<2x32xi32>
    %c0_i32 = arith.constant 0 : i32
    %9 = vector.broadcast %c0_i32 : i32 to vector<2x32xi32>
    %10 = arith.cmpi sge, %8, %9 : vector<2x32xi32>
    %c-1_i32_4 = arith.constant -1 : i32
    %11 = vector.broadcast %c-1_i32_4 : i32 to vector<2x32xi32>
    %12 = arith.addi %4, %11 : vector<2x32xi32>
    %c32_i32 = arith.constant 32 : i32
    %13 = vector.broadcast %c32_i32 : i32 to vector<2x32xi32>
    %14 = arith.cmpi slt, %12, %13 : vector<2x32xi32>
    %15 = arith.andi %10, %14 : vector<2x32xi1>
    %cst_5 = arith.constant 0.000000e+00 : f32
    %16 = vector.broadcast %cst_5 : f32 to vector<2x32xf32>
    %17 = arith.select %15, %6, %16 : vector<2x32xi1>, vector<2x32xf32>
    %c0_6 = arith.constant 0 : index
    %18 = memref.load %arg1[%c0_6] : memref<3xf32, #tpu.memory_space<smem>>
    %19 = vector.broadcast %18 : f32 to vector<2x32xf32>
    %20 = arith.mulf %19, %17 : vector<2x32xf32>
    %21 = arith.addf %5, %20 : vector<2x32xf32>
    %c1 = arith.constant 1 : index
    %22 = memref.load %arg1[%c1] : memref<3xf32, #tpu.memory_space<smem>>
    %23 = vector.broadcast %22 : f32 to vector<2x32xf32>
    %24 = arith.mulf %23, %3 : vector<2x32xf32>
    %25 = arith.addf %21, %24 : vector<2x32xf32>
    %c31_i32 = arith.constant 31 : i32
    %26 = tpu.dynamic_rotate %3 by %c31_i32 dim 1 : vector<2x32xf32>, i32 -> vector<2x32xf32>
    %c1_i32_7 = arith.constant 1 : i32
    %27 = vector.broadcast %c1_i32_7 : i32 to vector<2x32xi32>
    %28 = arith.addi %4, %27 : vector<2x32xi32>
    %c0_i32_8 = arith.constant 0 : i32
    %29 = vector.broadcast %c0_i32_8 : i32 to vector<2x32xi32>
    %30 = arith.cmpi sge, %28, %29 : vector<2x32xi32>
    %c1_i32_9 = arith.constant 1 : i32
    %31 = vector.broadcast %c1_i32_9 : i32 to vector<2x32xi32>
    %32 = arith.addi %4, %31 : vector<2x32xi32>
    %c32_i32_10 = arith.constant 32 : i32
    %33 = vector.broadcast %c32_i32_10 : i32 to vector<2x32xi32>
    %34 = arith.cmpi slt, %32, %33 : vector<2x32xi32>
    %35 = arith.andi %30, %34 : vector<2x32xi1>
    %cst_11 = arith.constant 0.000000e+00 : f32
    %36 = vector.broadcast %cst_11 : f32 to vector<2x32xf32>
    %37 = arith.select %35, %26, %36 : vector<2x32xi1>, vector<2x32xf32>
    %c2 = arith.constant 2 : index
    %38 = memref.load %arg1[%c2] : memref<3xf32, #tpu.memory_space<smem>>
    %39 = vector.broadcast %38 : f32 to vector<2x32xf32>
    %40 = arith.mulf %39, %37 : vector<2x32xf32>
    %41 = arith.addf %25, %40 : vector<2x32xf32>
    %42 = arith.negf %41 : vector<2x32xf32>
    %43 = math.exp %42 : vector<2x32xf32>
    %cst_12 = arith.constant 1.000000e+00 : f32
    %44 = vector.broadcast %cst_12 : f32 to vector<2x32xf32>
    %45 = arith.addf %44, %43 : vector<2x32xf32>
    %46 = arith.divf %44, %45 : vector<2x32xf32>
    %47 = vector.shape_cast %46 : vector<2x32xf32> to vector<2x32x1xf32>
    %48 = vector.broadcast %47 : vector<2x32x1xf32> to vector<2x32x256xf32>
    %49 = arith.mulf %0, %48 : vector<2x32x256xf32>
    %c0_13 = arith.constant 0 : index
    %c0_14 = arith.constant 0 : index
    %c0_15 = arith.constant 0 : index
    %50 = vector.load %arg3[%c0_13, %c0_14, %c0_15] : memref<2x32x256xf32, #tpu.memory_space<vmem>>, vector<2x32x256xf32>
    tpu.vector_store %arg3[%c0_13, %c0_14, %c0_15], %49 {strides = array<i32>} : memref<2x32x256xf32, #tpu.memory_space<vmem>>, vector<2x32x256xf32>,
    return
  }
  func.func @transform_0(%arg0: i32) -> i32 {
    %c0_i32 = arith.constant 0 : i32
    %c0_i32_0 = arith.constant 0 : i32
    return %c0_i32 : i32
  }
  func.func @transform_1(%arg0: i32) -> (i32, i32, i32) {
    %c0_i32 = arith.constant 0 : i32
    %c0_i32_0 = arith.constant 0 : i32
    %c0_i32_1 = arith.constant 0 : i32
    return %arg0, %c0_i32, %c0_i32_0 : i32, i32, i32
  }
  func.func @transform_2(%arg0: i32) -> (i32, i32, i32) {
    %c0_i32 = arith.constant 0 : i32
    %c0_i32_0 = arith.constant 0 : i32
    %c0_i32_1 = arith.constant 0 : i32
    return %arg0, %c0_i32, %c0_i32_0 : i32, i32, i32
  }
}

</mosaic_0001>

<llo_original>
// kernel: tpu_custom_call.1
$region0: #{tpu_custom_call.1}
  #allocation0 [shape = 'u32[]', space=smem, size = 0x4, offset = 0x4, fixed_abs, tag = 'smem constant byte address 0x4 - core index']
  #allocation1 [shape = 'u32[144,128]{1,0:T(1,128)}', space=vmem, size = 0x12000, scoped, tag = 'internal scratch']
  %s0 = inlined_call_operand.hbm [shape: f32[3], index: 0, kind: input, shape index: {}]
  %s1 = inlined_call_operand.hbm [shape: f32[4,32,256], index: 1, kind: input, shape index: {}]
  %s2 = inlined_call_operand.hbm [shape: f32[4,32,256], index: 2, kind: output, shape index: {}]
  %s3 = sld [smem:[#allocation0]]
  $region49: #{tpu_custom_call.1} parent=0
    _
  %s5 = ssub.s32 1, %s3
  %s6 = scalar_select 0, %s5, %s3
  $region1: #{tpu_custom_call.1} parent=0
    #allocation2 [shape = 'u8[512]{0}', space=smem, size = 0x200, scoped, tag = 'input window, operand 0, single buffered']
    #allocation3 [shape = 's32[2]{0}', space=sflag, size = 0x8, scoped, tag = 'scoped memory for tpu_custom_call.1']
    #allocation4 [shape = 's32[2]{0}', space=sflag, size = 0x8, scoped, tag = 'scoped memory for tpu_custom_call.1']
    #allocation5 [shape = 's32[2]{0}', space=sflag, size = 0x8, scoped, tag = 'scoped memory for tpu_custom_call.1']
    #allocation6 [shape = 'u8[131072]{0}', space=vmem, size = 0x20000, scoped, tag = 'input window, operand 1']
    #allocation7 [shape = 'u8[131072]{0}', space=vmem, size = 0x20000, scoped, tag = 'output window, operand 0']
    %7 = vsyncpa [#allocation5], 0
    %8 = vsyncpa [#allocation3], 0
    %s9 = scalar_lea.sflag [#allocation3], 1
    %10 = vsyncpa %s9, 0
    %11 = vsyncpa [#allocation4], 0
    %s12 = scalar_lea.sflag [#allocation4], 1
    %13 = vsyncpa %s12, 0
    loop: start=0, step=1, limit=4
    $region2: #{tpu_custom_call.1} parent=1 // loop_pre_header
      _
    $region3: #{tpu_custom_call.1} parent=1 // loop_header
      %s15 = sphi 0, %s19
      %p16 = scmp.ge.s32.totalorder %s15, 4
      %s23 = sphi 0, %s23
      %s25 = sphi 0, %s23
      %s26 = sphi 0, %s25
      %s40 = sphi 0, %s26
      %s46 = sphi 0, %s48
      %s49 = sphi 0, %s46
      %s50 = sphi 0, %s49
      %s66 = sphi 0, %s50
      %s72 = sphi 0, %s74
      %s75 = sphi 0, %s72
      %s76 = sphi 0, %s75
      %s92 = sphi 0, %s76
    $region4: #{tpu_custom_call.1} parent=1 // loop_header_branch
      %18 = sbr.rel (%p16) target = $region8
    $region5: #{tpu_custom_call.1} parent=1 // loop_body
      %s20 = ssub.s32 %s15, 1
      %s21 = ssub.s32 %s15, 2
      %s22 = sadd.s32 %s15, 1
      %s24 = sadd.s32 %s23, 1
      %p27 = scmp.eq.s32.totalorder %s15, 1
      %p28 = scmp.ne.s32.totalorder %s23, %s25
      %p29 = scmp.eq.s32.totalorder %s15, 0
      %p30 = por %p28, %p29
      %p31 = scmp.ne.s32.totalorder %s23, %s25
      %p32 = scmp.eq.s32.totalorder %s20, 1
      %p33 = por %p31, %p32
      %p34 = scmp.ne.s32.totalorder %s25, %s26
      %p35 = scmp.eq.s32.totalorder %s20, 0
      %p36 = por %p34, %p35
      %p37 = scmp.ne.s32.totalorder %s25, %s26
      %p38 = scmp.eq.s32.totalorder %s21, 1
      %p39 = por %p37, %p38
      %p41 = scmp.ne.s32.totalorder %s26, %s40
      %p42 = scmp.eq.s32.totalorder %s21, 0
      %p43 = por %p41, %p42
      %s44 = ssub.s32 %s15, %s22
      %p45 = scmp.eq.s32.totalorder %s44, 0
      %s47 = sadd.s32 %s46, 1
      %s48 = scalar_select %p45, %s46, %s47
      %p51 = pneg %p45
      %p52 = scmp.eq.s32.totalorder %s15, 1
      %p53 = por %p51, %p52
      %p54 = scmp.ne.s32.totalorder %s46, %s49
      %p55 = scmp.eq.s32.totalorder %s15, 0
      %p56 = por %p54, %p55
      %p57 = scmp.ne.s32.totalorder %s46, %s49
      %p58 = scmp.eq.s32.totalorder %s20, 1
      %p59 = por %p57, %p58
      %p60 = scmp.ne.s32.totalorder %s49, %s50
      %p61 = scmp.eq.s32.totalorder %s20, 0
      %p62 = por %p60, %p61
      %p63 = scmp.ne.s32.totalorder %s49, %s50
      %p64 = scmp.eq.s32.totalorder %s21, 1
      %p65 = por %p63, %p64
      %p67 = scmp.ne.s32.totalorder %s50, %s66
      %p68 = scmp.eq.s32.totalorder %s21, 0
      %p69 = por %p67, %p68
      %s70 = ssub.s32 %s15, %s22
      %p71 = scmp.eq.s32.totalorder %s70, 0
      %s73 = sadd.s32 %s72, 1
      %s74 = scalar_select %p71, %s72, %s73
      %p77 = pneg %p71
      %p78 = scmp.eq.s32.totalorder %s15, 1
      %p79 = por %p77, %p78
      %p80 = scmp.ne.s32.totalorder %s72, %s75
      %p81 = scmp.eq.s32.totalorder %s15, 0
      %p82 = por %p80, %p81
      %p83 = scmp.ne.s32.totalorder %s72, %s75
      %p84 = scmp.eq.s32.totalorder %s20, 1
      %p85 = por %p83, %p84
      %p86 = scmp.ne.s32.totalorder %s75, %s76
      %p87 = scmp.eq.s32.totalorder %s20, 0
      %p88 = por %p86, %p87
      %p89 = scmp.ne.s32.totalorder %s75, %s76
      %p90 = scmp.eq.s32.totalorder %s21, 1
      %p91 = por %p89, %p90
      %p93 = scmp.ne.s32.totalorder %s76, %s92
      %p94 = scmp.eq.s32.totalorder %s21, 0
      %p95 = por %p93, %p94
      %p96 = scmp.le.s32.totalorder 1, %s15
      %p97 = scmp.lt.s32.totalorder %s15, 3
      %p98 = pnand %p96, %p97
      %p99 = pneg %p98
      // Predicated region
      $region9: #{tpu_custom_call.1} parent=5 // pred_check
        _
      $region10: #{tpu_custom_call.1} parent=5 // pred_check_branch
        %101 = sbr.rel (%p98) target = $region12
      $region11: #{tpu_custom_call.1} parent=5 // pred_region
        %s102 = ssub.s32 %s15, 1
        // Predicated region
        $region13: #{tpu_custom_call.1} parent=11 // pred_check
          %p103 = pneg %p36
        $region14: #{tpu_custom_call.1} parent=11 // pred_check_branch
          %105 = sbr.rel (%p103) target = $region16
        $region15: #{tpu_custom_call.1} parent=11 // pred_region
          %s107 = ssub.s32 16, 16
          %108 = vsyncadd [#allocation5], %s107
          %111 = dma.hbm_to_smem %s0, 16, [#allocation2], [#allocation5]
        $region16: #{tpu_custom_call.1} parent=11 // pred_fallthru
          _
      $region12: #{tpu_custom_call.1} parent=5 // pred_fallthru
        _
      %p112 = scmp.lt.s32.totalorder %s15, 2
      // Predicated region
      $region17: #{tpu_custom_call.1} parent=5 // pred_check
        %p113 = pneg %p112
      $region18: #{tpu_custom_call.1} parent=5 // pred_check_branch
        %115 = sbr.rel (%p113) target = $region20
      $region19: #{tpu_custom_call.1} parent=5 // pred_region
        // Predicated region
        $region21: #{tpu_custom_call.1} parent=19 // pred_check
          %p116 = pneg %p56
        $region22: #{tpu_custom_call.1} parent=19 // pred_check_branch
          %118 = sbr.rel (%p116) target = $region24
        $region23: #{tpu_custom_call.1} parent=19 // pred_region
          %s119 = sand.u32 %s46, 1
          %s120 = scalar_lea.sflag [#allocation3], %s119
          %s121 = sand.u32 %s46, 1
          %s122 = smul.addr %s121, 128
          %s123 = scalar_lea.vmem [#allocation6], %s122
          %s124 = smul.u32 2, %s15
          %s126 = ssub.s32 2048, 2048
          %127 = vsyncadd %s120, %s126
          %s128 = smul.addr %s124, 8
          %s129 = smul.addr %s128, 128
          %s130 = scalar_lea.hbm %s1, %s129
          %s131 = sshll.u32 %s123, 4
          %s132 = int_to_ptr.vmem [resolvable:$true] %s131
          %137 = dma.hbm_to_vmem [thread:$0]  %s130, 2048, %s132, %s120, 256, 256, 16
        $region24: #{tpu_custom_call.1} parent=19 // pred_fallthru
          _
      $region20: #{tpu_custom_call.1} parent=5 // pred_fallthru
        _
      %p138 = scmp.le.s32.totalorder 1, %s15
      %p139 = scmp.lt.s32.totalorder %s15, 3
      %p140 = pnand %p138, %p139
      %p141 = pneg %p140
      // Predicated region
      $region25: #{tpu_custom_call.1} parent=5 // pred_check
        _
      $region26: #{tpu_custom_call.1} parent=5 // pred_check_branch
        %143 = sbr.rel (%p140) target = $region28
      $region27: #{tpu_custom_call.1} parent=5 // pred_region
        %s144 = ssub.s32 %s15, 1
        // Predicated region
        $region29: #{tpu_custom_call.1} parent=27 // pred_check
          %p145 = pneg %p36
        $region30: #{tpu_custom_call.1} parent=27 // pred_check_branch
          %147 = sbr.rel (%p145) target = $region32
        $region31: #{tpu_custom_call.1} parent=27 // pred_region
          %148 = dma.done [#allocation5], 16
        $region32: #{tpu_custom_call.1} parent=27 // pred_fallthru
          _
        %s149 = sand.u32 %s49, 1
        %s150 = scalar_lea.sflag [#allocation3], %s149
        %s151 = sand.u32 %s49, 1
        %s152 = smul.addr %s151, 128
        %s153 = scalar_lea.vmem [#allocation6], %s152
        // Predicated region
        $region33: #{tpu_custom_call.1} parent=27 // pred_check
          %p154 = pneg %p62
        $region34: #{tpu_custom_call.1} parent=27 // pred_check_branch
          %156 = sbr.rel (%p154) target = $region36
        $region35: #{tpu_custom_call.1} parent=27 // pred_region
          %157 = dma.done %s150, 2048
        $region36: #{tpu_custom_call.1} parent=27 // pred_fallthru
          _
        %158 = sfence
        %p159 = pneg %p36
        %p160 = pneg %p33
        %s161 = sand.u32 %s49, 1
        %s162 = scalar_lea.sflag [#allocation3], %s161
        %s163 = sand.u32 %s49, 1
        %s164 = smul.addr %s163, 128
        %s165 = scalar_lea.vmem [#allocation6], %s164
        %p166 = pneg %p62
        %p167 = pneg %p59
        %p168 = pneg %p88
        %p169 = pneg %p85
        %s170 = sand.u32 %s75, 1
        %s171 = scalar_lea.sflag [#allocation4], %s170
        %s172 = sand.u32 %s75, 1
        %s173 = smul.addr %s172, 128
        %s174 = scalar_lea.vmem [#allocation7], %s173
        %s175 = smul.u32 2, %s20
        %s176 = smul.u32 2, %s20
        %v177 = vld [vmem:[%s153] sm:$0xff]
        %v178 = vld [vmem:[%s153 + $0x8] sm:$0xff]
        %v179 = vld [vmem:[%s153 + $0x10] sm:$0xff]
        %v180 = vld [vmem:[%s153 + $0x18] sm:$0xff]
        %v181 = vld [vmem:[%s153 + $0x20] sm:$0xff]
        %v182 = vld [vmem:[%s153 + $0x28] sm:$0xff]
        %v183 = vld [vmem:[%s153 + $0x30] sm:$0xff]
        %v184 = vld [vmem:[%s153 + $0x38] sm:$0xff]
        %v185 = vld [vmem:[%s153 + $0x40] sm:$0xff]
        %v186 = vld [vmem:[%s153 + $0x48] sm:$0xff]
        %v187 = vld [vmem:[%s153 + $0x50] sm:$0xff]
        %v188 = vld [vmem:[%s153 + $0x58] sm:$0xff]
        %v189 = vld [vmem:[%s153 + $0x60] sm:$0xff]
        %v190 = vld [vmem:[%s153 + $0x68] sm:$0xff]
        %v191 = vld [vmem:[%s153 + $0x70] sm:$0xff]
        %v192 = vld [vmem:[%s153 + $0x78] sm:$0xff]
        %v193 = vadd.f32 %v177, %v178
        %194 = vadd.xlane.f32.xlu0 %v193
        %v195 = vpop.xlane.xlu0 %194
        %v196 = vadd.f32 %v179, %v180
        %197 = vadd.xlane.f32.xlu0 %v196
        %v198 = vpop.xlane.xlu0 %197
        %v199 = vadd.f32 %v181, %v182
        %200 = vadd.xlane.f32.xlu0 %v199
        %v201 = vpop.xlane.xlu0 %200
        %v202 = vadd.f32 %v183, %v184
        %203 = vadd.xlane.f32.xlu0 %v202
        %v204 = vpop.xlane.xlu0 %203
        %v205 = vadd.f32 %v185, %v186
        %206 = vadd.xlane.f32.xlu0 %v205
        %v207 = vpop.xlane.xlu0 %206
        %v208 = vadd.f32 %v187, %v188
        %209 = vadd.xlane.f32.xlu0 %v208
        %v210 = vpop.xlane.xlu0 %209
        %v211 = vadd.f32 %v189, %v190
        %212 = vadd.xlane.f32.xlu0 %v211
        %v213 = vpop.xlane.xlu0 %212
        %v214 = vadd.f32 %v191, %v192
        %215 = vadd.xlane.f32.xlu0 %v214
        %v216 = vpop.xlane.xlu0 %215
        %v217 = vmul.f32 %v195, 0.00390625
        %v218 = vmul.f32 %v198, 0.00390625
        %v219 = vmul.f32 %v201, 0.00390625
        %v220 = vmul.f32 %v204, 0.00390625
        %v221 = vmul.f32 %v207, 0.00390625
        %v222 = vmul.f32 %v210, 0.00390625
        %v223 = vmul.f32 %v213, 0.00390625
        %v224 = vmul.f32 %v216, 0.00390625
        %v225 = vlaneseq
        %v226 = vand.u32 %v225, 127
        %v235 = vlaneseq
        %v236 = vshrl.u32 %v235, 7
        %v237 = vsub.s32 %v226, %v236
        %v238 = vrot.slane %v217, %v237
        %v239 = vadd.s32 %v226, 4294967288
        %v240 = vlaneseq
        %v241 = vshrl.u32 %v240, 7
        %v242 = vsub.s32 %v239, %v241
        %v243 = vrot.slane %v218, %v242
        %vm244 = vcmask 130112
        %v245 = vsel %vm244, %v243, %v238
        %v246 = vadd.s32 %v226, 4294967280
        %v247 = vlaneseq
        %v248 = vshrl.u32 %v247, 7
        %v249 = vsub.s32 %v246, %v248
        %v250 = vrot.slane %v219, %v249
        %vm251 = vcmask 195712
        %v252 = vsel %vm251, %v250, %v245
        %v253 = vadd.s32 %v226, 4294967272
        %v254 = vlaneseq
        %v255 = vshrl.u32 %v254, 7
        %v256 = vsub.s32 %v253, %v255
        %v257 = vrot.slane %v220, %v256
        %vm258 = vcmask 261312
        %v259 = vsel %vm258, %v257, %v252
        %v260 = vlaneseq
        %v261 = vshrl.u32 %v260, 7
        %v262 = vsub.s32 %v226, %v261
        %v263 = vrot.slane %v221, %v262
        %v264 = vlaneseq
        %v265 = vshrl.u32 %v264, 7
        %v266 = vsub.s32 %v239, %v265
        %v267 = vrot.slane %v222, %v266
        %v268 = vsel %vm244, %v267, %v263
        %v269 = vlaneseq
        %v270 = vshrl.u32 %v269, 7
        %v271 = vsub.s32 %v246, %v270
        %v272 = vrot.slane %v223, %v271
        %v273 = vsel %vm251, %v272, %v268
        %v274 = vlaneseq
        %v275 = vshrl.u32 %v274, 7
        %v276 = vsub.s32 %v253, %v275
        %v277 = vrot.slane %v224, %v276
        %v278 = vsel %vm258, %v277, %v273
        %vm279 = vcmask 1041409
        %v280 = vsel %vm279, %v278, %v259
        %vm282 = vcmask 1047808
        %283 = vrot.lane.b32.xlu0 %v280, 32
        %v284 = vpop.permute.xlu0 %283
        %v285 = vsel %vm282, %v284, %v280
        %286 = vrot.lane.b32.xlu0 %v285, 32
        %v287 = vpop.permute.xlu0 %286
        %v288 = vsel %vm282, %v287, %v280
        %v289 = vadd.s32 %v226, 4294967295
        %vm290 = vcmp.ge.s32.totalorder %v289, 0
        %vm291 = vcmp.lt.s32.totalorder %v289, 32
        %vm292 = vmand %vm290, %vm291
        %294 = vrot.lane.b32.xlu0 %v288, 97
        %v295 = vpop.permute.xlu0 %294
        %v297 = vsel %vm292, %v295, 0.0
        %s298 = sld [smem:[#allocation2]]
        %v299 = vstv %s298
        %v300 = vmul.f32 %v299, %v297
        %v301 = vadd.f32 %v300, 0.0
        %s302 = sld [smem:[#allocation2 + $0x1]]
        %v303 = vstv %s302
        %v304 = vmul.f32 %v303, %v217
        %v305 = vmul.f32 %v303, %v218
        %v306 = vmul.f32 %v303, %v219
        %v307 = vmul.f32 %v303, %v220
        %v308 = vmul.f32 %v303, %v221
        %v309 = vmul.f32 %v303, %v222
        %v310 = vmul.f32 %v303, %v223
        %v311 = vmul.f32 %v303, %v224
        %v320 = vlaneseq
        %v321 = vshrl.u32 %v320, 7
        %v322 = vsub.s32 %v226, %v321
        %v323 = vrot.slane %v304, %v322
        %v324 = vlaneseq
        %v325 = vshrl.u32 %v324, 7
        %v326 = vsub.s32 %v239, %v325
        %v327 = vrot.slane %v305, %v326
        %v328 = vsel %vm244, %v327, %v323
        %v329 = vlaneseq
        %v330 = vshrl.u32 %v329, 7
        %v331 = vsub.s32 %v246, %v330
        %v332 = vrot.slane %v306, %v331
        %v333 = vsel %vm251, %v332, %v328
        %v334 = vlaneseq
        %v335 = vshrl.u32 %v334, 7
        %v336 = vsub.s32 %v253, %v335
        %v337 = vrot.slane %v307, %v336
        %v338 = vsel %vm258, %v337, %v333
        %v339 = vlaneseq
        %v340 = vshrl.u32 %v339, 7
        %v341 = vsub.s32 %v226, %v340
        %v342 = vrot.slane %v308, %v341
        %v343 = vlaneseq
        %v344 = vshrl.u32 %v343, 7
        %v345 = vsub.s32 %v239, %v344
        %v346 = vrot.slane %v309, %v345
        %v347 = vsel %vm244, %v346, %v342
        %v348 = vlaneseq
        %v349 = vshrl.u32 %v348, 7
        %v350 = vsub.s32 %v246, %v349
        %v351 = vrot.slane %v310, %v350
        %v352 = vsel %vm251, %v351, %v347
        %v353 = vlaneseq
        %v354 = vshrl.u32 %v353, 7
        %v355 = vsub.s32 %v253, %v354
        %v356 = vrot.slane %v311, %v355
        %v357 = vsel %vm258, %v356, %v352
        %v358 = vsel %vm279, %v357, %v338
        %v360 = vadd.f32 %v301, %v358
        %v361 = vadd.s32 %v226, 1
        %vm362 = vcmp.ge.s32.totalorder %v361, 0
        %vm363 = vcmp.lt.s32.totalorder %v361, 32
        %vm364 = vmand %vm362, %vm363
        %365 = vrot.lane.b32.xlu0 %v288, 127
        %v366 = vpop.permute.xlu0 %365
        %v368 = vsel %vm364, %v366, 0.0
        %s369 = sld [smem:[#allocation2 + $0x2]]
        %v370 = vstv %s369
        %v371 = vmul.f32 %v370, %v368
        %v372 = vadd.f32 %v360, %v371
        %v373 = vxor.u32 %v372, 2147483648
        %v374 = vmul.f32 %v373, 1.442695
        %v375 = vpow.pop %v374
        %v376 = vadd.f32 %v375, 1.0
        %v377 = vrcp.pop %v376
        %v378 = vmul.f32 1.0, %v377
        %v379 = vlaneseq
        %v380 = vshrl.u32 %v379, 7
        %v381 = vsub.s32 0, %v380
        %v382 = vrot.slane %v378, %v381
        %384 = vbcast.lane.b32.xlu0 %v382, 256
        %v385 = vpop.permute.xlu0 %384
        %s387 = sor.u32 256, 8
        %388 = vbcast.lane.b32.xlu0 %v382, %s387
        %v389 = vpop.permute.xlu0 %388
        %s391 = sor.u32 256, 16
        %392 = vbcast.lane.b32.xlu0 %v382, %s391
        %v393 = vpop.permute.xlu0 %392
        %s395 = sor.u32 256, 24
        %396 = vbcast.lane.b32.xlu0 %v382, %s395
        %v397 = vpop.permute.xlu0 %396
        %v398 = vlaneseq
        %v399 = vshrl.u32 %v398, 7
        %v400 = vsub.s32 1, %v399
        %v401 = vrot.slane %v378, %v400
        %403 = vbcast.lane.b32.xlu0 %v401, 256
        %v404 = vpop.permute.xlu0 %403
        %s406 = sor.u32 256, 8
        %407 = vbcast.lane.b32.xlu0 %v401, %s406
        %v408 = vpop.permute.xlu0 %407
        %s410 = sor.u32 256, 16
        %411 = vbcast.lane.b32.xlu0 %v401, %s410
        %v412 = vpop.permute.xlu0 %411
        %s414 = sor.u32 256, 24
        %415 = vbcast.lane.b32.xlu0 %v401, %s414
        %v416 = vpop.permute.xlu0 %415
        %v417 = vmul.f32 %v177, %v385
        %v418 = vmul.f32 %v178, %v385
        %v419 = vmul.f32 %v179, %v389
        %v420 = vmul.f32 %v180, %v389
        %v421 = vmul.f32 %v181, %v393
        %v422 = vmul.f32 %v182, %v393
        %v423 = vmul.f32 %v183, %v397
        %v424 = vmul.f32 %v184, %v397
        %v425 = vmul.f32 %v185, %v404
        %v426 = vmul.f32 %v186, %v404
        %v427 = vmul.f32 %v187, %v408
        %v428 = vmul.f32 %v188, %v408
        %v429 = vmul.f32 %v189, %v412
        %v430 = vmul.f32 %v190, %v412
        %v431 = vmul.f32 %v191, %v416
        %v432 = vmul.f32 %v192, %v416
        %433 = vst [vmem:[%s174] sm:$0xff] %v417
        %434 = vst [vmem:[%s174 + $0x8] sm:$0xff] %v418
        %435 = vst [vmem:[%s174 + $0x10] sm:$0xff] %v419
        %436 = vst [vmem:[%s174 + $0x18] sm:$0xff] %v420
        %437 = vst [vmem:[%s174 + $0x20] sm:$0xff] %v421
        %438 = vst [vmem:[%s174 + $0x28] sm:$0xff] %v422
        %439 = vst [vmem:[%s174 + $0x30] sm:$0xff] %v423
        %440 = vst [vmem:[%s174 + $0x38] sm:$0xff] %v424
        %441 = vst [vmem:[%s174 + $0x40] sm:$0xff] %v425
        %442 = vst [vmem:[%s174 + $0x48] sm:$0xff] %v426
        %443 = vst [vmem:[%s174 + $0x50] sm:$0xff] %v427
        %444 = vst [vmem:[%s174 + $0x58] sm:$0xff] %v428
        %445 = vst [vmem:[%s174 + $0x60] sm:$0xff] %v429
        %446 = vst [vmem:[%s174 + $0x68] sm:$0xff] %v430
        %447 = vst [vmem:[%s174 + $0x70] sm:$0xff] %v431
        %448 = vst [vmem:[%s174 + $0x78] sm:$0xff] %v432
        %s449 = sand.u32 %s75, 1
        %s450 = scalar_lea.sflag [#allocation4], %s449
        %s451 = sand.u32 %s75, 1
        %s452 = smul.addr %s451, 128
        %s453 = scalar_lea.vmem [#allocation7], %s452
        // Predicated region
        $region37: #{tpu_custom_call.1} parent=27 // pred_check
          %p454 = pneg %p85
        $region38: #{tpu_custom_call.1} parent=27 // pred_check_branch
          %456 = sbr.rel (%p454) target = $region40
        $region39: #{tpu_custom_call.1} parent=27 // pred_region
          %s457 = smul.u32 2, %s20
          %s459 = ssub.s32 2048, 2048
          %460 = vsyncadd %s450, %s459
          %s461 = smul.addr %s457, 8
          %s462 = smul.addr %s461, 128
          %s463 = scalar_lea.hbm %s2, %s462
          %s464 = sshll.u32 %s453, 4
          %s465 = int_to_ptr.vmem [resolvable:$true] %s464
          %470 = dma.vmem_to_hbm [thread:$0]  %s465, 2048, %s463, %s450, 256, 256, 16
        $region40: #{tpu_custom_call.1} parent=27 // pred_fallthru
          _
      $region28: #{tpu_custom_call.1} parent=5 // pred_fallthru
        _
      %p471 = scmp.le.s32.totalorder 2, %s15
      // Predicated region
      $region41: #{tpu_custom_call.1} parent=5 // pred_check
        %p472 = pneg %p471
      $region42: #{tpu_custom_call.1} parent=5 // pred_check_branch
        %474 = sbr.rel (%p472) target = $region44
      $region43: #{tpu_custom_call.1} parent=5 // pred_region
        %s475 = ssub.s32 %s15, 2
        // Predicated region
        $region45: #{tpu_custom_call.1} parent=43 // pred_check
          %p476 = pneg %p91
        $region46: #{tpu_custom_call.1} parent=43 // pred_check_branch
          %478 = sbr.rel (%p476) target = $region48
        $region47: #{tpu_custom_call.1} parent=43 // pred_region
          %s479 = sand.u32 %s76, 1
          %s480 = scalar_lea.sflag [#allocation4], %s479
          %s481 = sand.u32 %s76, 1
          %s482 = smul.addr %s481, 128
          %s483 = scalar_lea.vmem [#allocation7], %s482
          %484 = dma.done %s480, 2048
        $region48: #{tpu_custom_call.1} parent=43 // pred_fallthru
          _
      $region44: #{tpu_custom_call.1} parent=5 // pred_fallthru
        _
    $region6: #{tpu_custom_call.1} parent=1 // loop_footer
      %s19 = sadd.s32 1, %s15
    $region7: #{tpu_custom_call.1} parent=1 // loop_footer_branch
      %14 = sbr.rel target = $region3
    $region8: #{tpu_custom_call.1} parent=1 // loop_exit
      _
    %485 = vsyncpa [#allocation3], 1
    %s486 = scalar_lea.sflag [#allocation3], 1
    %487 = vsyncpa %s486, 1
    %488 = vsyncpa [#allocation4], 1
    %s489 = scalar_lea.sflag [#allocation4], 1
    %490 = vsyncpa %s489, 1
    %491 = vsyncpa [#allocation5], 1
    %s492 = scalar_lea.sflag [#allocation5], 1
    %493 = vsyncpa %s492, 1

</llo_original>
